<compile_context>
chip_gen: v7x
topology: tpu7x:2x2x1
jax: 0.10.0
libtpu: 0.0.40
codegen_flags: <defaults>
</compile_context>

<pallas_src>
import functools

import jax
import jax.numpy as jnp
from jax.experimental import pallas as pl
from jax.experimental.pallas import tpu as pltpu

_MIB = 1024 * 1024


def _round_up(x, m):
    return ((x + m - 1) // m) * m


def _pick_tiling(n_rows, max_tile, row_align):
    """Split n_rows into equal row_align-aligned tiles <= max_tile with minimal padding."""
    max_tile = max(row_align, (max_tile // row_align) * row_align)
    n_steps = max(1, -(-n_rows // max_tile))
    tile = _round_up(-(-n_rows // n_steps), row_align)
    return tile, n_steps, tile * n_steps


def _vmem_limit(need_bytes):
    # Right-sized scoped-VMEM request: headroom for compiler temporaries but
    # well below v7x's 64 MiB physical VMEM per TensorCore.
    return int(min(48 * _MIB, max(32 * _MIB, 1.5 * need_bytes)))


# ---------------------------------------------------------------------------
# Standalone RBF expansion: out = exp(-gamma * (d - c)^2)
# ---------------------------------------------------------------------------
def _rbf_kernel(d_ref, c_ref, o_ref, *, neg_gamma):
    d = d_ref[...].astype(jnp.float32)       # (TE, 1) — keep compute in f32
    c = c_ref[...]                           # (1, K) f32 centers on the lane axis
    diff = d - c                             # (TE, K)
    o_ref[...] = jnp.exp(neg_gamma * diff * diff).astype(o_ref.dtype)


def rbf_expansion(distances, centers, gamma=10.0, tile_e=8192, out_dtype=None):
    """distances: (E,) or (E,1); centers: (K,) f32 -> (E, K)."""
    if distances.ndim == 1:
        distances = distances[:, None]
    E = distances.shape[0]
    K = centers.shape[0]
    out_dtype = jnp.dtype(distances.dtype if out_dtype is None else out_dtype)
    out_bytes = out_dtype.itemsize
    row_align = 16 if out_bytes < 4 else 8

    tile, n_steps, E_pad = _pick_tiling(E, tile_e, row_align)
    if E_pad != E:
        distances = jnp.pad(distances, ((0, E_pad - E), (0, 0)))

    kernel = functools.partial(_rbf_kernel, neg_gamma=-float(gamma))

    # VMEM need: (tile,1) distance buffer is lane-padded to 128 lanes (x2 buf),
    # output tile (x2 buf), plus one f32 intermediate.
    need = tile * 128 * 4 * 2 + tile * K * out_bytes * 2 + tile * K * 4 * 2

    out = pl.pallas_call(
        kernel,
        out_shape=jax.ShapeDtypeStruct((E_pad, K), out_dtype),
        grid_spec=pltpu.PrefetchScalarGridSpec(
            num_scalar_prefetch=0,
            grid=(n_steps,),
            in_specs=[
                pl.BlockSpec((tile, 1), lambda i: (i, 0)),
                # Grid-invariant block index -> pipeline revisit check keeps
                # the 512 B centers tile resident (no per-step re-DMA).
                pl.BlockSpec((1, K), lambda i: (0, 0)),
            ],
            out_specs=pl.BlockSpec((tile, K), lambda i: (i, 0)),
        ),
        compiler_params=pltpu.CompilerParams(
            dimension_semantics=("parallel",),
            vmem_limit_bytes=_vmem_limit(need),
        ),
        cost_estimate=pl.CostEstimate(
            flops=3 * E_pad * K,
            transcendentals=E_pad * K,
            bytes_accessed=4 * (E_pad + K) + out_bytes * E_pad * K,
        ),
    )(distances, centers.reshape(1, K).astype(jnp.float32))
    return out[:E]


# ---------------------------------------------------------------------------
# Fused RBF + SchNet filter network (mlp_edge):
#   edge_feature = SiLU(rbf(d) @ W1 + b1) @ W2 + b2
# The (tile_e, K) RBF block never leaves VMEM; both matmuls use bf16 MXU
# operands with f32 accumulation.
# ---------------------------------------------------------------------------
def _fused_rbf_edge_mlp_kernel(d_ref, c_ref, w1_ref, b1_ref, w2_ref, b2_ref,
                               o_ref, *, neg_gamma):
    # Elementwise math stays f32 (v5e has no bf16 VPU/EUP); only the MXU
    # operands are cast to bf16.
    d = d_ref[...].astype(jnp.float32)                        # (TE, 1)
    c = c_ref[...]                                            # (1, K)
    diff = d - c
    rbf = jnp.exp(neg_gamma * diff * diff)                    # (TE, K) f32, stays in VMEM

    h = jnp.dot(rbf.astype(jnp.bfloat16), w1_ref[...],
                preferred_element_type=jnp.float32) + b1_ref[...]      # (TE, H) f32
    # SiLU: divide replaced by EUP approx reciprocal (frees VALU slots).
    h = h * pl.reciprocal(1.0 + jnp.exp(-h), approx=True)

    out = jnp.dot(h.astype(jnp.bfloat16), w2_ref[...],
                  preferred_element_type=jnp.float32) + b2_ref[...]    # (TE, H) f32
    o_ref[...] = out.astype(o_ref.dtype)


def fused_rbf_edge_mlp(distances, centers, w1, b1, w2, b2, gamma=10.0,
                       tile_e=2048, out_dtype=jnp.bfloat16):
    """distances: (E,) or (E,1); centers: (K,); w1: (K,H); w2: (H,H) -> (E,H)."""
    if distances.ndim == 1:
        distances = distances[:, None]
    E = distances.shape[0]
    K = centers.shape[0]
    H = w1.shape[1]
    assert w1.shape == (K, H) and w2.shape == (H, H)
    out_dtype = jnp.dtype(out_dtype)
    out_bytes = out_dtype.itemsize
    row_align = 16 if out_bytes < 4 else 8

    tile, n_steps, E_pad = _pick_tiling(E, tile_e, row_align)
    if E_pad != E:
        distances = jnp.pad(distances, ((0, E_pad - E), (0, 0)))

    kernel = functools.partial(_fused_rbf_edge_mlp_kernel, neg_gamma=-float(gamma))

    # Weights go to the MXU in bf16; biases stay f32 (added to the f32 acc).
    w1_bf = w1.astype(jnp.bfloat16)
    w2_bf = w2.astype(jnp.bfloat16)

    need = (tile * 128 * 4 * 2                 # lane-padded (tile,1) distance blocks
            + 2 * 2 * (K * H + H * H)          # bf16 weights, double-buffered
            + tile * H * out_bytes * 2         # output tiles
            + tile * (6 * K + 10 * H))         # f32/bf16 intermediates (rbf, h, out)

    out = pl.pallas_call(
        kernel,
        out_shape=jax.ShapeDtypeStruct((E_pad, H), out_dtype),
        grid_spec=pltpu.PrefetchScalarGridSpec(
            num_scalar_prefetch=0,
            grid=(n_steps,),
            in_specs=[
                pl.BlockSpec((tile, 1), lambda i: (i, 0)),   # distances
                # Grid-invariant operands: constant block index, so the
                # pipeline elides their re-DMA after step 0.  (pl.Buffered(1)
                # would additionally save ~1 MiB of double-buffer VMEM; not
                # needed at this budget.)
                pl.BlockSpec((1, K), lambda i: (0, 0)),      # centers (f32)
                pl.BlockSpec((K, H), lambda i: (0, 0)),      # W1 (bf16)
                pl.BlockSpec((1, H), lambda i: (0, 0)),      # b1 (f32)
                pl.BlockSpec((H, H), lambda i: (0, 0)),      # W2 (bf16)
                pl.BlockSpec((1, H), lambda i: (0, 0)),      # b2 (f32)
            ],
            out_specs=pl.BlockSpec((tile, H), lambda i: (i, 0)),
        ),
        compiler_params=pltpu.CompilerParams(
            dimension_semantics=("parallel",),
            vmem_limit_bytes=_vmem_limit(need),
        ),
        cost_estimate=pl.CostEstimate(
            flops=2 * E_pad * (K * H + H * H) + 8 * E_pad * (K + H),
            transcendentals=E_pad * (K + 2 * H),
            bytes_accessed=(4 * E_pad + 2 * (K * H + H * H) + 4 * (K + 2 * H)
                            + out_bytes * E_pad * H),
        ),
    )(distances,
      centers.reshape(1, K).astype(jnp.float32),
      w1_bf, b1.reshape(1, H).astype(jnp.float32),
      w2_bf, b2.reshape(1, H).astype(jnp.float32))
    return out[:E]


# ---------------------------------------------------------------------------
# Pure-JAX references
# ---------------------------------------------------------------------------
def rbf_expansion_ref(distances, centers, gamma=10.0):
    if distances.ndim == 1:
        distances = distances[:, None]
    diff = distances - centers[None, :]
    return jnp.exp(-gamma * diff ** 2)


def fused_rbf_edge_mlp_ref(distances, centers, w1, b1, w2, b2, gamma=10.0):
    rbf = rbf_expansion_ref(distances, centers, gamma)
    h = jnp.dot(rbf, w1, precision=jax.lax.Precision.HIGHEST) + b1
    h = h / (1.0 + jnp.exp(-h))
    return jnp.dot(h, w2, precision=jax.lax.Precision.HIGHEST) + b2


if __name__ == "__main__":
    num_kernels = 128     # module default rbf_kernels
    cutoff = 6.0
    gamma = 10.0
    hidden_dim = 256      # small stand-in for embed_dim=512
    num_edges = 300       # deliberately NOT a multiple of 8 / 16 / tile size

    key = jax.random.PRNGKey(0)
    k_d, k_w1, k_b1, k_w2, k_b2 = jax.random.split(key, 5)

    # nn.Parameter(torch.linspace(0, cutoff, K)) equivalent
    centers = jnp.linspace(0.0, cutoff, num_kernels, dtype=jnp.float32)
    distances = jax.random.uniform(k_d, (num_edges, 1), dtype=jnp.float32,
                                   minval=0.0, maxval=cutoff)

    # --- standalone RBF expansion, f32 output (single large tile) ---
    rbf_out = jax.block_until_ready(rbf_expansion(distances, centers, gamma=gamma))
    rbf_ref = rbf_expansion_ref(distances, centers, gamma=gamma)
    assert rbf_out.shape == (num_edges, num_kernels)
    assert jnp.allclose(rbf_out, rbf_ref, atol=1e-5, rtol=1e-5)

    # --- standalone RBF, bf16 output + multi-step grid with bounded tail pad ---
    rbf_bf16 = jax.block_until_ready(
        rbf_expansion(distances, centers, gamma=gamma,
                      tile_e=256, out_dtype=jnp.bfloat16))
    assert rbf_bf16.dtype == jnp.bfloat16
    assert rbf_bf16.shape == (num_edges, num_kernels)
    assert jnp.allclose(rbf_bf16.astype(jnp.float32), rbf_ref,
                        atol=1e-2, rtol=1e-2)

    # --- fused RBF + filter MLP (mlp_edge of SchNetInteractionBlock) ---
    s1 = 1.0 / float(num_kernels) ** 0.5
    s2 = 1.0 / float(hidden_dim) ** 0.5
    w1 = jax.random.uniform(k_w1, (num_kernels, hidden_dim), jnp.float32, -s1, s1)
    b1 = jax.random.uniform(k_b1, (hidden_dim,), jnp.float32, -s1, s1)
    w2 = jax.random.uniform(k_w2, (hidden_dim, hidden_dim), jnp.float32, -s2, s2)
    b2 = jax.random.uniform(k_b2, (hidden_dim,), jnp.float32, -s2, s2)

    edge_ref = fused_rbf_edge_mlp_ref(distances, centers, w1, b1, w2, b2,
                                      gamma=gamma)

    # default: bf16 MXU matmuls + bf16 writeback
    edge_bf16 = jax.block_until_ready(
        fused_rbf_edge_mlp(distances, centers, w1, b1, w2, b2, gamma=gamma))
    assert edge_bf16.dtype == jnp.bfloat16
    assert edge_bf16.shape == (num_edges, hidden_dim)
    assert jnp.allclose(edge_bf16.astype(jnp.float32), edge_ref,
                        atol=3e-2, rtol=3e-2)

    # f32 writeback variant (still bf16 MXU operands, f32 accumulation)
    edge_f32 = jax.block_until_ready(
        fused_rbf_edge_mlp(distances, centers, w1, b1, w2, b2, gamma=gamma,
                           out_dtype=jnp.float32))
    assert edge_f32.dtype == jnp.float32
    assert jnp.allclose(edge_f32, edge_ref, atol=2e-2, rtol=2e-2)

    print("KERNEL_OK")
</pallas_src>

<mosaic_0001>
module attributes {stable_mosaic.version = 11 : i64} {
  func.func @_rbf_kernel(%arg0: i32, %arg1: memref<304x1xf32, #tpu.memory_space<vmem>>, %arg2: memref<1x128xf32, #tpu.memory_space<vmem>>, %arg3: memref<304x128xf32, #tpu.memory_space<vmem>>) attributes {dimension_semantics = [#tpu.dimension_semantics<parallel>], iteration_bounds = array<i64: 1>, scalar_prefetch = 0 : i64, scratch_operands = 0 : i64, tpu.core_type = #tpu.core_type<tc>, window_params = [{transform_indices = @transform_0, window_bounds = array<i64: 304, 1>}, {pipeline_mode = #tpu.pipeline_mode<synchronous>, transform_indices = @transform_1, window_bounds = array<i64: 1, 128>}, {transform_indices = @transform_2, window_bounds = array<i64: 304, 128>}]} {
    %c0 = arith.constant 0 : index
    %c0_0 = arith.constant 0 : index
    %0 = vector.load %arg1[%c0, %c0_0] : memref<304x1xf32, #tpu.memory_space<vmem>>, vector<304x1xf32>
    %c0_1 = arith.constant 0 : index
    %c0_2 = arith.constant 0 : index
    %1 = vector.load %arg2[%c0_1, %c0_2] : memref<1x128xf32, #tpu.memory_space<vmem>>, vector<1x128xf32>
    %2 = vector.broadcast %0 : vector<304x1xf32> to vector<304x128xf32>
    %3 = vector.broadcast %1 : vector<1x128xf32> to vector<304x128xf32>
    %4 = arith.subf %2, %3 : vector<304x128xf32>
    %cst = arith.constant -1.000000e+01 : f32
    %5 = vector.broadcast %cst : f32 to vector<304x128xf32>
    %6 = arith.mulf %5, %4 : vector<304x128xf32>
    %7 = arith.mulf %6, %4 : vector<304x128xf32>
    %8 = math.exp %7 : vector<304x128xf32>
    %c0_3 = arith.constant 0 : index
    %c0_4 = arith.constant 0 : index
    %9 = vector.load %arg3[%c0_3, %c0_4] : memref<304x128xf32, #tpu.memory_space<vmem>>, vector<304x128xf32>
    tpu.vector_store %arg3[%c0_3, %c0_4], %8 {strides = array<i32>} : memref<304x128xf32, #tpu.memory_space<vmem>>, vector<304x128xf32>,
    return
  }
  func.func @transform_0(%arg0: i32) -> (i32, i32) {
    %c0_i32 = arith.constant 0 : i32
    %c0_i32_0 = arith.constant 0 : i32
    return %arg0, %c0_i32 : i32, i32
  }
  func.func @transform_1(%arg0: i32) -> (i32, i32) {
    %c0_i32 = arith.constant 0 : i32
    %c0_i32_0 = arith.constant 0 : i32
    %c0_i32_1 = arith.constant 0 : i32
    return %c0_i32, %c0_i32_0 : i32, i32
  }
  func.func @transform_2(%arg0: i32) -> (i32, i32) {
    %c0_i32 = arith.constant 0 : i32
    %c0_i32_0 = arith.constant 0 : i32
    return %arg0, %c0_i32 : i32, i32
  }
}

</mosaic_0001>

<llo_original>
// kernel: tpu_custom_call.1
$region0: #{tpu_custom_call.1}
  #allocation0 [shape = 'u32[]', space=smem, size = 0x4, offset = 0x4, fixed_abs, tag = 'smem constant byte address 0x4 - core index']
  #allocation1 [shape = 'u32[144,128]{1,0:T(1,128)}', space=vmem, size = 0x12000, scoped, tag = 'internal scratch']
  %s0 = inlined_call_operand.vmem [shape: f32[304,1], index: 0, kind: input, shape index: {}]
  %s1 = inlined_call_operand.vmem [shape: f32[1,128], index: 1, kind: input, shape index: {}]
  %s2 = inlined_call_operand.hbm [shape: f32[304,128], index: 2, kind: output, shape index: {}]
  %s3 = sld [smem:[#allocation0]]
  $region18: #{tpu_custom_call.1} parent=0
    _
  %s5 = ssub.s32 1, %s3
  %s6 = scalar_select 0, %s5, %s3
  $region1: #{tpu_custom_call.1} parent=0
    #allocation2 [shape = 'u8[155648]{0}', space=vmem, size = 0x26000, scoped, tag = 'output window, operand 0, single buffered']
    #allocation3 [shape = 's32[1]{0}', space=sflag, size = 0x4, scoped, tag = 'scoped memory for tpu_custom_call.1']
    %7 = vsyncpa [#allocation3], 0
    // Predicated region
    $region2: #{tpu_custom_call.1} parent=1 // pred_check
      _
    $region3: #{tpu_custom_call.1} parent=1 // pred_check_branch
      %9 = sbr.rel (0) target = $region5
    $region4: #{tpu_custom_call.1} parent=1 // pred_region
      _
    $region5: #{tpu_custom_call.1} parent=1 // pred_fallthru
      _
    // Predicated region
    $region6: #{tpu_custom_call.1} parent=1 // pred_check
      _
    $region7: #{tpu_custom_call.1} parent=1 // pred_check_branch
      %11 = sbr.rel (0) target = $region9
    $region8: #{tpu_custom_call.1} parent=1 // pred_region
      _
    $region9: #{tpu_custom_call.1} parent=1 // pred_fallthru
      _
    %v12 = vld [vmem:[%s0] sm:$0xff]
    %v13 = vld [vmem:[%s0 + $0x8] sm:$0xff]
    %v14 = vld [vmem:[%s0 + $0x10] sm:$0xff]
    %v15 = vld [vmem:[%s0 + $0x18] sm:$0xff]
    %v16 = vld [vmem:[%s0 + $0x20] sm:$0xff]
    %v17 = vld [vmem:[%s0 + $0x28] sm:$0xff]
    %v18 = vld [vmem:[%s0 + $0x30] sm:$0xff]
    %v19 = vld [vmem:[%s0 + $0x38] sm:$0xff]
    %v20 = vld [vmem:[%s0 + $0x40] sm:$0xff]
    %v21 = vld [vmem:[%s0 + $0x48] sm:$0xff]
    %v22 = vld [vmem:[%s0 + $0x50] sm:$0xff]
    %v23 = vld [vmem:[%s0 + $0x58] sm:$0xff]
    %v24 = vld [vmem:[%s0 + $0x60] sm:$0xff]
    %v25 = vld [vmem:[%s0 + $0x68] sm:$0xff]
    %v26 = vld [vmem:[%s0 + $0x70] sm:$0xff]
    %v27 = vld [vmem:[%s0 + $0x78] sm:$0xff]
    %v28 = vld [vmem:[%s0 + $0x80] sm:$0xff]
    %v29 = vld [vmem:[%s0 + $0x88] sm:$0xff]
    %v30 = vld [vmem:[%s0 + $0x90] sm:$0xff]
    %v31 = vld [vmem:[%s0 + $0x98] sm:$0xff]
    %v32 = vld [vmem:[%s0 + $0xa0] sm:$0xff]
    %v33 = vld [vmem:[%s0 + $0xa8] sm:$0xff]
    %v34 = vld [vmem:[%s0 + $0xb0] sm:$0xff]
    %v35 = vld [vmem:[%s0 + $0xb8] sm:$0xff]
    %v36 = vld [vmem:[%s0 + $0xc0] sm:$0xff]
    %v37 = vld [vmem:[%s0 + $0xc8] sm:$0xff]
    %v38 = vld [vmem:[%s0 + $0xd0] sm:$0xff]
    %v39 = vld [vmem:[%s0 + $0xd8] sm:$0xff]
    %v40 = vld [vmem:[%s0 + $0xe0] sm:$0xff]
    %v41 = vld [vmem:[%s0 + $0xe8] sm:$0xff]
    %v42 = vld [vmem:[%s0 + $0xf0] sm:$0xff]
    %v43 = vld [vmem:[%s0 + $0xf8] sm:$0xff]
    %v44 = vld [vmem:[%s0 + $0x100] sm:$0xff]
    %v45 = vld [vmem:[%s0 + $0x108] sm:$0xff]
    %v46 = vld [vmem:[%s0 + $0x110] sm:$0xff]
    %v47 = vld [vmem:[%s0 + $0x118] sm:$0xff]
    %v48 = vld [vmem:[%s0 + $0x120] sm:$0xff]
    %v49 = vld [vmem:[%s0 + $0x128] sm:$0xff]
    %v50 = vld [vmem:[%s1] sm:$0x1]
    %52 = vset.pattern.permute.xlu0 0
    %53 = vperm.xlu0 %52, %v12
    %v54 = vpop.permute.xlu0 %53
    %57 = vset.pattern.permute.xlu0 0
    %58 = vperm.xlu0 %57, %v13
    %v59 = vpop.permute.xlu0 %58
    %62 = vset.pattern.permute.xlu0 0
    %63 = vperm.xlu0 %62, %v14
    %v64 = vpop.permute.xlu0 %63
    %67 = vset.pattern.permute.xlu0 0
    %68 = vperm.xlu0 %67, %v15
    %v69 = vpop.permute.xlu0 %68
    %72 = vset.pattern.permute.xlu0 0
    %73 = vperm.xlu0 %72, %v16
    %v74 = vpop.permute.xlu0 %73
    %77 = vset.pattern.permute.xlu0 0
    %78 = vperm.xlu0 %77, %v17
    %v79 = vpop.permute.xlu0 %78
    %82 = vset.pattern.permute.xlu0 0
    %83 = vperm.xlu0 %82, %v18
    %v84 = vpop.permute.xlu0 %83
    %87 = vset.pattern.permute.xlu0 0
    %88 = vperm.xlu0 %87, %v19
    %v89 = vpop.permute.xlu0 %88
    %92 = vset.pattern.permute.xlu0 0
    %93 = vperm.xlu0 %92, %v20
    %v94 = vpop.permute.xlu0 %93
    %97 = vset.pattern.permute.xlu0 0
    %98 = vperm.xlu0 %97, %v21
    %v99 = vpop.permute.xlu0 %98
    %102 = vset.pattern.permute.xlu0 0
    %103 = vperm.xlu0 %102, %v22
    %v104 = vpop.permute.xlu0 %103
    %107 = vset.pattern.permute.xlu0 0
    %108 = vperm.xlu0 %107, %v23
    %v109 = vpop.permute.xlu0 %108
    %112 = vset.pattern.permute.xlu0 0
    %113 = vperm.xlu0 %112, %v24
    %v114 = vpop.permute.xlu0 %113
    %117 = vset.pattern.permute.xlu0 0
    %118 = vperm.xlu0 %117, %v25
    %v119 = vpop.permute.xlu0 %118
    %122 = vset.pattern.permute.xlu0 0
    %123 = vperm.xlu0 %122, %v26
    %v124 = vpop.permute.xlu0 %123
    %127 = vset.pattern.permute.xlu0 0
    %128 = vperm.xlu0 %127, %v27
    %v129 = vpop.permute.xlu0 %128
    %132 = vset.pattern.permute.xlu0 0
    %133 = vperm.xlu0 %132, %v28
    %v134 = vpop.permute.xlu0 %133
    %137 = vset.pattern.permute.xlu0 0
    %138 = vperm.xlu0 %137, %v29
    %v139 = vpop.permute.xlu0 %138
    %142 = vset.pattern.permute.xlu0 0
    %143 = vperm.xlu0 %142, %v30
    %v144 = vpop.permute.xlu0 %143
    %147 = vset.pattern.permute.xlu0 0
    %148 = vperm.xlu0 %147, %v31
    %v149 = vpop.permute.xlu0 %148
    %152 = vset.pattern.permute.xlu0 0
    %153 = vperm.xlu0 %152, %v32
    %v154 = vpop.permute.xlu0 %153
    %157 = vset.pattern.permute.xlu0 0
    %158 = vperm.xlu0 %157, %v33
    %v159 = vpop.permute.xlu0 %158
    %162 = vset.pattern.permute.xlu0 0
    %163 = vperm.xlu0 %162, %v34
    %v164 = vpop.permute.xlu0 %163
    %167 = vset.pattern.permute.xlu0 0
    %168 = vperm.xlu0 %167, %v35
    %v169 = vpop.permute.xlu0 %168
    %172 = vset.pattern.permute.xlu0 0
    %173 = vperm.xlu0 %172, %v36
    %v174 = vpop.permute.xlu0 %173
    %177 = vset.pattern.permute.xlu0 0
    %178 = vperm.xlu0 %177, %v37
    %v179 = vpop.permute.xlu0 %178
    %182 = vset.pattern.permute.xlu0 0
    %183 = vperm.xlu0 %182, %v38
    %v184 = vpop.permute.xlu0 %183
    %187 = vset.pattern.permute.xlu0 0
    %188 = vperm.xlu0 %187, %v39
    %v189 = vpop.permute.xlu0 %188
    %192 = vset.pattern.permute.xlu0 0
    %193 = vperm.xlu0 %192, %v40
    %v194 = vpop.permute.xlu0 %193
    %197 = vset.pattern.permute.xlu0 0
    %198 = vperm.xlu0 %197, %v41
    %v199 = vpop.permute.xlu0 %198
    %202 = vset.pattern.permute.xlu0 0
    %203 = vperm.xlu0 %202, %v42
    %v204 = vpop.permute.xlu0 %203
    %207 = vset.pattern.permute.xlu0 0
    %208 = vperm.xlu0 %207, %v43
    %v209 = vpop.permute.xlu0 %208
    %212 = vset.pattern.permute.xlu0 0
    %213 = vperm.xlu0 %212, %v44
    %v214 = vpop.permute.xlu0 %213
    %217 = vset.pattern.permute.xlu0 0
    %218 = vperm.xlu0 %217, %v45
    %v219 = vpop.permute.xlu0 %218
    %222 = vset.pattern.permute.xlu0 0
    %223 = vperm.xlu0 %222, %v46
    %v224 = vpop.permute.xlu0 %223
    %227 = vset.pattern.permute.xlu0 0
    %228 = vperm.xlu0 %227, %v47
    %v229 = vpop.permute.xlu0 %228
    %232 = vset.pattern.permute.xlu0 0
    %233 = vperm.xlu0 %232, %v48
    %v234 = vpop.permute.xlu0 %233
    %237 = vset.pattern.permute.xlu0 0
    %238 = vperm.xlu0 %237, %v49
    %v239 = vpop.permute.xlu0 %238
    %v242 = vlaneseq
    %v243 = vshrl.u32 %v242, 7
    %v244 = vsub.s32 0, %v243
    %v245 = vrot.slane %v50, %v244
    %v247 = vsub.f32 %v54, %v245
    %v248 = vsub.f32 %v59, %v245
    %v249 = vsub.f32 %v64, %v245
    %v250 = vsub.f32 %v69, %v245
    %v251 = vsub.f32 %v74, %v245
    %v252 = vsub.f32 %v79, %v245
    %v253 = vsub.f32 %v84, %v245
    %v254 = vsub.f32 %v89, %v245
    %v255 = vsub.f32 %v94, %v245
    %v256 = vsub.f32 %v99, %v245
    %v257 = vsub.f32 %v104, %v245
    %v258 = vsub.f32 %v109, %v245
    %v259 = vsub.f32 %v114, %v245
    %v260 = vsub.f32 %v119, %v245
    %v261 = vsub.f32 %v124, %v245
    %v262 = vsub.f32 %v129, %v245
    %v263 = vsub.f32 %v134, %v245
    %v264 = vsub.f32 %v139, %v245
    %v265 = vsub.f32 %v144, %v245
    %v266 = vsub.f32 %v149, %v245
    %v267 = vsub.f32 %v154, %v245
    %v268 = vsub.f32 %v159, %v245
    %v269 = vsub.f32 %v164, %v245
    %v270 = vsub.f32 %v169, %v245
    %v271 = vsub.f32 %v174, %v245
    %v272 = vsub.f32 %v179, %v245
    %v273 = vsub.f32 %v184, %v245
    %v274 = vsub.f32 %v189, %v245
    %v275 = vsub.f32 %v194, %v245
    %v276 = vsub.f32 %v199, %v245
    %v277 = vsub.f32 %v204, %v245
    %v278 = vsub.f32 %v209, %v245
    %v279 = vsub.f32 %v214, %v245
    %v280 = vsub.f32 %v219, %v245
    %v281 = vsub.f32 %v224, %v245
    %v282 = vsub.f32 %v229, %v245
    %v283 = vsub.f32 %v234, %v245
    %v284 = vsub.f32 %v239, %v245
    %v285 = vmul.f32 %v247, -10.0
    %v286 = vmul.f32 %v248, -10.0
    %v287 = vmul.f32 %v249, -10.0
    %v288 = vmul.f32 %v250, -10.0
    %v289 = vmul.f32 %v251, -10.0
    %v290 = vmul.f32 %v252, -10.0
    %v291 = vmul.f32 %v253, -10.0
    %v292 = vmul.f32 %v254, -10.0
    %v293 = vmul.f32 %v255, -10.0
    %v294 = vmul.f32 %v256, -10.0
    %v295 = vmul.f32 %v257, -10.0
    %v296 = vmul.f32 %v258, -10.0
    %v297 = vmul.f32 %v259, -10.0
    %v298 = vmul.f32 %v260, -10.0
    %v299 = vmul.f32 %v261, -10.0
    %v300 = vmul.f32 %v262, -10.0
    %v301 = vmul.f32 %v263, -10.0
    %v302 = vmul.f32 %v264, -10.0
    %v303 = vmul.f32 %v265, -10.0
    %v304 = vmul.f32 %v266, -10.0
    %v305 = vmul.f32 %v267, -10.0
    %v306 = vmul.f32 %v268, -10.0
    %v307 = vmul.f32 %v269, -10.0
    %v308 = vmul.f32 %v270, -10.0
    %v309 = vmul.f32 %v271, -10.0
    %v310 = vmul.f32 %v272, -10.0
    %v311 = vmul.f32 %v273, -10.0
    %v312 = vmul.f32 %v274, -10.0
    %v313 = vmul.f32 %v275, -10.0
    %v314 = vmul.f32 %v276, -10.0
    %v315 = vmul.f32 %v277, -10.0
    %v316 = vmul.f32 %v278, -10.0
    %v317 = vmul.f32 %v279, -10.0
    %v318 = vmul.f32 %v280, -10.0
    %v319 = vmul.f32 %v281, -10.0
    %v320 = vmul.f32 %v282, -10.0
    %v321 = vmul.f32 %v283, -10.0
    %v322 = vmul.f32 %v284, -10.0
    %v323 = vmul.f32 %v285, %v247
    %v324 = vmul.f32 %v286, %v248
    %v325 = vmul.f32 %v287, %v249
    %v326 = vmul.f32 %v288, %v250
    %v327 = vmul.f32 %v289, %v251
    %v328 = vmul.f32 %v290, %v252
    %v329 = vmul.f32 %v291, %v253
    %v330 = vmul.f32 %v292, %v254
    %v331 = vmul.f32 %v293, %v255
    %v332 = vmul.f32 %v294, %v256
    %v333 = vmul.f32 %v295, %v257
    %v334 = vmul.f32 %v296, %v258
    %v335 = vmul.f32 %v297, %v259
    %v336 = vmul.f32 %v298, %v260
    %v337 = vmul.f32 %v299, %v261
    %v338 = vmul.f32 %v300, %v262
    %v339 = vmul.f32 %v301, %v263
    %v340 = vmul.f32 %v302, %v264
    %v341 = vmul.f32 %v303, %v265
    %v342 = vmul.f32 %v304, %v266
    %v343 = vmul.f32 %v305, %v267
    %v344 = vmul.f32 %v306, %v268
    %v345 = vmul.f32 %v307, %v269
    %v346 = vmul.f32 %v308, %v270
    %v347 = vmul.f32 %v309, %v271
    %v348 = vmul.f32 %v310, %v272
    %v349 = vmul.f32 %v311, %v273
    %v350 = vmul.f32 %v312, %v274
    %v351 = vmul.f32 %v313, %v275
    %v352 = vmul.f32 %v314, %v276
    %v353 = vmul.f32 %v315, %v277
    %v354 = vmul.f32 %v316, %v278
    %v355 = vmul.f32 %v317, %v279
    %v356 = vmul.f32 %v318, %v280
    %v357 = vmul.f32 %v319, %v281
    %v358 = vmul.f32 %v320, %v282
    %v359 = vmul.f32 %v321, %v283
    %v360 = vmul.f32 %v322, %v284
    %v361 = vmul.f32 %v323, 1.442695
    %v362 = vpow.pop %v361
    %v363 = vmul.f32 %v324, 1.442695
    %v364 = vpow.pop %v363
    %v365 = vmul.f32 %v325, 1.442695
    %v366 = vpow.pop %v365
    %v367 = vmul.f32 %v326, 1.442695
    %v368 = vpow.pop %v367
    %v369 = vmul.f32 %v327, 1.442695
    %v370 = vpow.pop %v369
    %v371 = vmul.f32 %v328, 1.442695
    %v372 = vpow.pop %v371
    %v373 = vmul.f32 %v329, 1.442695
    %v374 = vpow.pop %v373
    %v375 = vmul.f32 %v330, 1.442695
    %v376 = vpow.pop %v375
    %v377 = vmul.f32 %v331, 1.442695
    %v378 = vpow.pop %v377
    %v379 = vmul.f32 %v332, 1.442695
    %v380 = vpow.pop %v379
    %v381 = vmul.f32 %v333, 1.442695
    %v382 = vpow.pop %v381
    %v383 = vmul.f32 %v334, 1.442695
    %v384 = vpow.pop %v383
    %v385 = vmul.f32 %v335, 1.442695
    %v386 = vpow.pop %v385
    %v387 = vmul.f32 %v336, 1.442695
    %v388 = vpow.pop %v387
    %v389 = vmul.f32 %v337, 1.442695
    %v390 = vpow.pop %v389
    %v391 = vmul.f32 %v338, 1.442695
    %v392 = vpow.pop %v391
    %v393 = vmul.f32 %v339, 1.442695
    %v394 = vpow.pop %v393
    %v395 = vmul.f32 %v340, 1.442695
    %v396 = vpow.pop %v395
    %v397 = vmul.f32 %v341, 1.442695
    %v398 = vpow.pop %v397
    %v399 = vmul.f32 %v342, 1.442695
    %v400 = vpow.pop %v399
    %v401 = vmul.f32 %v343, 1.442695
    %v402 = vpow.pop %v401
    %v403 = vmul.f32 %v344, 1.442695
    %v404 = vpow.pop %v403
    %v405 = vmul.f32 %v345, 1.442695
    %v406 = vpow.pop %v405
    %v407 = vmul.f32 %v346, 1.442695
    %v408 = vpow.pop %v407
    %v409 = vmul.f32 %v347, 1.442695
    %v410 = vpow.pop %v409
    %v411 = vmul.f32 %v348, 1.442695
    %v412 = vpow.pop %v411
    %v413 = vmul.f32 %v349, 1.442695
    %v414 = vpow.pop %v413
    %v415 = vmul.f32 %v350, 1.442695
    %v416 = vpow.pop %v415
    %v417 = vmul.f32 %v351, 1.442695
    %v418 = vpow.pop %v417
    %v419 = vmul.f32 %v352, 1.442695
    %v420 = vpow.pop %v419
    %v421 = vmul.f32 %v353, 1.442695
    %v422 = vpow.pop %v421
    %v423 = vmul.f32 %v354, 1.442695
    %v424 = vpow.pop %v423
    %v425 = vmul.f32 %v355, 1.442695
    %v426 = vpow.pop %v425
    %v427 = vmul.f32 %v356, 1.442695
    %v428 = vpow.pop %v427
    %v429 = vmul.f32 %v357, 1.442695
    %v430 = vpow.pop %v429
    %v431 = vmul.f32 %v358, 1.442695
    %v432 = vpow.pop %v431
    %v433 = vmul.f32 %v359, 1.442695
    %v434 = vpow.pop %v433
    %v435 = vmul.f32 %v360, 1.442695
    %v436 = vpow.pop %v435
    %437 = vst [vmem:[#allocation2] sm:$0xff] %v362
    %438 = vst [vmem:[#allocation2 + $0x8] sm:$0xff] %v364
    %439 = vst [vmem:[#allocation2 + $0x10] sm:$0xff] %v366
    %440 = vst [vmem:[#allocation2 + $0x18] sm:$0xff] %v368
    %441 = vst [vmem:[#allocation2 + $0x20] sm:$0xff] %v370
    %442 = vst [vmem:[#allocation2 + $0x28] sm:$0xff] %v372
    %443 = vst [vmem:[#allocation2 + $0x30] sm:$0xff] %v374
    %444 = vst [vmem:[#allocation2 + $0x38] sm:$0xff] %v376
    %445 = vst [vmem:[#allocation2 + $0x40] sm:$0xff] %v378
    %446 = vst [vmem:[#allocation2 + $0x48] sm:$0xff] %v380
    %447 = vst [vmem:[#allocation2 + $0x50] sm:$0xff] %v382
    %448 = vst [vmem:[#allocation2 + $0x58] sm:$0xff] %v384
    %449 = vst [vmem:[#allocation2 + $0x60] sm:$0xff] %v386
    %450 = vst [vmem:[#allocation2 + $0x68] sm:$0xff] %v388
    %451 = vst [vmem:[#allocation2 + $0x70] sm:$0xff] %v390
    %452 = vst [vmem:[#allocation2 + $0x78] sm:$0xff] %v392
    %453 = vst [vmem:[#allocation2 + $0x80] sm:$0xff] %v394
    %454 = vst [vmem:[#allocation2 + $0x88] sm:$0xff] %v396
    %455 = vst [vmem:[#allocation2 + $0x90] sm:$0xff] %v398
    %456 = vst [vmem:[#allocation2 + $0x98] sm:$0xff] %v400
    %457 = vst [vmem:[#allocation2 + $0xa0] sm:$0xff] %v402
    %458 = vst [vmem:[#allocation2 + $0xa8] sm:$0xff] %v404
    %459 = vst [vmem:[#allocation2 + $0xb0] sm:$0xff] %v406
    %460 = vst [vmem:[#allocation2 + $0xb8] sm:$0xff] %v408
    %461 = vst [vmem:[#allocation2 + $0xc0] sm:$0xff] %v410
    %462 = vst [vmem:[#allocation2 + $0xc8] sm:$0xff] %v412
    %463 = vst [vmem:[#allocation2 + $0xd0] sm:$0xff] %v414
    %464 = vst [vmem:[#allocation2 + $0xd8] sm:$0xff] %v416
    %465 = vst [vmem:[#allocation2 + $0xe0] sm:$0xff] %v418
    %466 = vst [vmem:[#allocation2 + $0xe8] sm:$0xff] %v420
    %467 = vst [vmem:[#allocation2 + $0xf0] sm:$0xff] %v422
    %468 = vst [vmem:[#allocation2 + $0xf8] sm:$0xff] %v424
    %469 = vst [vmem:[#allocation2 + $0x100] sm:$0xff] %v426
    %470 = vst [vmem:[#allocation2 + $0x108] sm:$0xff] %v428
    %471 = vst [vmem:[#allocation2 + $0x110] sm:$0xff] %v430
    %472 = vst [vmem:[#allocation2 + $0x118] sm:$0xff] %v432
    %473 = vst [vmem:[#allocation2 + $0x120] sm:$0xff] %v434
    %474 = vst [vmem:[#allocation2 + $0x128] sm:$0xff] %v436
    // Predicated region
    $region10: #{tpu_custom_call.1} parent=1 // pred_check
      _
    $region11: #{tpu_custom_call.1} parent=1 // pred_check_branch
      %476 = sbr.rel (0) target = $region13
    $region12: #{tpu_custom_call.1} parent=1 // pred_region
      %s478 = ssub.s32 4864, 4864
      %479 = vsyncadd [#allocation3], %s478
      %s480 = sshll.u32 [#allocation2], 4
      %s481 = int_to_ptr.vmem [resolvable:$true] %s480
      %486 = dma.vmem_to_hbm [thread:$0]  %s481, 4864, %s2, [#allocation3], 128, 128, 8
    $region13: #{tpu_custom_call.1} parent=1 // pred_fallthru
      _
    // Predicated region
    $region14: #{tpu_custom_call.1} parent=1 // pred_check
      _
    $region15: #{tpu_custom_call.1} parent=1 // pred_check_branch
      %488 = sbr.rel (0) target = $region17
    $region16: #{tpu_custom_call.1} parent=1 // pred_region
      %489 = dma.done [#allocation3], 4864
    $region17: #{tpu_custom_call.1} parent=1 // pred_fallthru
      _
    %490 = vsyncpa [#allocation3], 1

</llo_original>
